<compile_context>
chip_gen: v7x
topology: tpu7x:2x2x1
jax: 0.10.0
libtpu: 0.0.40
codegen_flags: <defaults>
</compile_context>

<pallas_src>
import functools

import jax
import jax.numpy as jnp
from jax.experimental import pallas as pl
from jax.experimental.pallas import tpu as pltpu


def _label_smoothing_kernel(tok_ref, out_ref, *, fill_value, confidence_value,
                            pad_token_id, vocab_tile):
    # tok_ref: (tb, 1) int32   (target token id per row; VMEM, resident across j)
    # out_ref: (tb, tv) float32 output tile
    tb, tv = out_ref.shape

    col0 = pl.program_id(1) * vocab_tile          # first global column of this tile
    tok = tok_ref[...]                            # (tb, 1) int32
    tok_local = tok - col0                        # token column in tile-local coords
    pad_local = pad_token_id - col0               # pad column in tile-local coords (scalar)

    lanes = jax.lax.broadcasted_iota(jnp.int32, (tb, tv), 1)

    # scatter_(1, trg_token_ids, confidence) over a smoothing-filled row.
    dist = jnp.where(lanes == tok_local,
                     jnp.float32(confidence_value),
                     jnp.float32(fill_value))

    # [:, pad_token_id] = 0.0  and  masked_fill_(trg == pad, 0.0), fused into one
    # select so the only store is the full-width tile write below.
    zero_mask = (lanes == pad_local) | (tok == pad_token_id)
    dist = jnp.where(zero_mask, jnp.float32(0.0), dist)

    out_ref[...] = dist.astype(out_ref.dtype)


def _pick_tile(dim, max_tile, align):
    """Full dim if it fits (always a legal block), else the largest aligned tile."""
    if dim <= max_tile:
        return dim
    return max(align, (max_tile // align) * align)


def label_smoothing_distribution(trg_token_ids_batch, *, smoothing_value, pad_token_id,
                                 trg_vocab_size, batch_tile=None, vocab_tile=None,
                                 out_dtype=jnp.float32):
    """Pallas equivalent of LabelSmoothingDistribution.forward.

    trg_token_ids_batch: (B, 1) integer array
    returns:             (B, trg_vocab_size) out_dtype (float32 by default, matching PyTorch)
    """
    assert 0.0 <= smoothing_value <= 1.0, "Smoothing value must be between 0.0 and 1.0"
    # TODO(synk): trg_vocab_size == 2 divides by zero exactly like the PyTorch module.
    B = trg_token_ids_batch.shape[0]

    confidence_value = 1.0 - smoothing_value
    fill_value = smoothing_value / (trg_vocab_size - 2)

    # Large, lane-dense output tiles.  Output buffer capped at 256 x 8192 f32 = 8 MiB
    # so the double-buffered working set (~16-20 MiB) fits comfortably even on v7x.
    if vocab_tile is None:
        vocab_tile = _pick_tile(trg_vocab_size, 8192, 128)
    if batch_tile is None:
        batch_tile = _pick_tile(B, 256, 8)

    grid = (pl.cdiv(B, batch_tile), pl.cdiv(trg_vocab_size, vocab_tile))

    kernel = functools.partial(
        _label_smoothing_kernel,
        fill_value=fill_value,
        confidence_value=confidence_value,
        pad_token_id=pad_token_id,
        vocab_tile=vocab_tile,
    )

    # Explicit VMEM budget: double-buffered output tile + (lane-padded) token block.
    out_tile_bytes = batch_tile * vocab_tile * jnp.dtype(out_dtype).itemsize
    tok_tile_bytes = batch_tile * 128 * 4
    vmem_limit = min(int(2 * (out_tile_bytes + tok_tile_bytes) + (4 << 20)), 48 << 20)

    return pl.pallas_call(
        kernel,
        out_shape=jax.ShapeDtypeStruct((B, trg_vocab_size), out_dtype),
        grid=grid,
        # Token block depends only on the batch grid index -> stays resident
        # across the (innermost) vocab axis; re-DMAed only when i changes.
        in_specs=[pl.BlockSpec((batch_tile, 1), lambda i, j: (i, 0))],
        out_specs=pl.BlockSpec((batch_tile, vocab_tile), lambda i, j: (i, j)),
        compiler_params=pltpu.CompilerParams(
            dimension_semantics=("parallel", "parallel"),
            vmem_limit_bytes=vmem_limit,
        ),
    )(trg_token_ids_batch.astype(jnp.int32))


def _reference(trg_token_ids_batch, *, smoothing_value, pad_token_id, trg_vocab_size):
    B = trg_token_ids_batch.shape[0]
    conf = 1.0 - smoothing_value
    fill = smoothing_value / (trg_vocab_size - 2)
    dist = jnp.full((B, trg_vocab_size), fill, dtype=jnp.float32)
    rows = jnp.arange(B)
    dist = dist.at[rows, trg_token_ids_batch[:, 0]].set(conf)
    dist = dist.at[:, pad_token_id].set(0.0)
    dist = jnp.where(trg_token_ids_batch == pad_token_id, 0.0, dist)
    return dist.astype(jnp.float32)


def _run_case(key, batch_size, trg_vocab_size, smoothing_value, pad_token_id, **tile_kwargs):
    trg = jax.random.randint(key, (batch_size, 1), 0, trg_vocab_size, dtype=jnp.int32)
    # exercise the masked_fill path: make at least one row the pad token
    trg = trg.at[0, 0].set(pad_token_id)

    out = label_smoothing_distribution(
        trg,
        smoothing_value=smoothing_value,
        pad_token_id=pad_token_id,
        trg_vocab_size=trg_vocab_size,
        **tile_kwargs,
    )
    out = jax.block_until_ready(out)

    ref = _reference(
        trg,
        smoothing_value=smoothing_value,
        pad_token_id=pad_token_id,
        trg_vocab_size=trg_vocab_size,
    )
    assert out.shape == (batch_size, trg_vocab_size)
    assert out.dtype == jnp.float32
    assert jnp.allclose(out, ref, atol=1e-6), (
        f"mismatch vs reference (B={batch_size}, V={trg_vocab_size}, tiles={tile_kwargs})")


if __name__ == "__main__":
    smoothing_value = 0.1
    pad_token_id = 0

    key = jax.random.PRNGKey(0)
    k1, k2, k3 = jax.random.split(key, 3)

    # Small divisible case: full-vocab / full-batch single tile.
    _run_case(k1, batch_size=16, trg_vocab_size=512,
              smoothing_value=smoothing_value, pad_token_id=pad_token_id)

    # Non-power-of-two vocab / batch: full-dim blocks (no divisibility asserts).
    _run_case(k2, batch_size=12, trg_vocab_size=1000,
              smoothing_value=smoothing_value, pad_token_id=pad_token_id)

    # Partial-tile case: explicit tiles that do NOT divide the array (cdiv grid).
    _run_case(k3, batch_size=20, trg_vocab_size=1280,
              smoothing_value=smoothing_value, pad_token_id=pad_token_id,
              batch_tile=16, vocab_tile=512)

    print("KERNEL_OK")
</pallas_src>

<mosaic_0001>
module attributes {stable_mosaic.version = 11 : i64} {
  func.func @_label_smoothing_kernel(%arg0: i32, %arg1: i32, %arg2: memref<16x1xi32, #tpu.memory_space<vmem>>, %arg3: memref<16x512xf32, #tpu.memory_space<vmem>>) attributes {dimension_semantics = [#tpu.dimension_semantics<parallel>, #tpu.dimension_semantics<parallel>], iteration_bounds = array<i64: 1, 1>, scalar_prefetch = 0 : i64, scratch_operands = 0 : i64, tpu.core_type = #tpu.core_type<tc>, window_params = [{transform_indices = @transform_0, window_bounds = array<i64: 16, 1>}, {transform_indices = @transform_1, window_bounds = array<i64: 16, 512>}]} {
    %c512_i32 = arith.constant 512 : i32
    %0 = arith.muli %arg1, %c512_i32 : i32
    %c0 = arith.constant 0 : index
    %c0_0 = arith.constant 0 : index
    %1 = vector.load %arg2[%c0, %c0_0] : memref<16x1xi32, #tpu.memory_space<vmem>>, vector<16x1xi32>
    %2 = vector.broadcast %0 : i32 to vector<16x1xi32>
    %3 = arith.subi %1, %2 : vector<16x1xi32>
    %c0_i32 = arith.constant 0 : i32
    %4 = arith.subi %c0_i32, %0 : i32
    %5 = tpu.iota {dimensions = array<i32: 1>} : vector<16x512xi32>
    %6 = vector.broadcast %3 : vector<16x1xi32> to vector<16x512xi32>
    %7 = arith.cmpi eq, %5, %6 : vector<16x512xi32>
    %cst = arith.constant 0.899999976 : f32
    %cst_1 = arith.constant 1.96078428E-4 : f32
    %8 = vector.broadcast %cst : f32 to vector<16x512xf32>
    %9 = vector.broadcast %cst_1 : f32 to vector<16x512xf32>
    %10 = arith.select %7, %8, %9 : vector<16x512xi1>, vector<16x512xf32>
    %11 = vector.broadcast %4 : i32 to vector<16x512xi32>
    %12 = arith.cmpi eq, %5, %11 : vector<16x512xi32>
    %c0_i32_2 = arith.constant 0 : i32
    %13 = vector.broadcast %c0_i32_2 : i32 to vector<16x1xi32>
    %14 = arith.cmpi eq, %1, %13 : vector<16x1xi32>
    %15 = vector.broadcast %14 : vector<16x1xi1> to vector<16x512xi1>
    %16 = arith.ori %12, %15 : vector<16x512xi1>
    %cst_3 = arith.constant 0.000000e+00 : f32
    %17 = vector.broadcast %cst_3 : f32 to vector<16x512xf32>
    %18 = arith.select %16, %17, %10 : vector<16x512xi1>, vector<16x512xf32>
    %c0_4 = arith.constant 0 : index
    %c0_5 = arith.constant 0 : index
    %19 = vector.load %arg3[%c0_4, %c0_5] : memref<16x512xf32, #tpu.memory_space<vmem>>, vector<16x512xf32>
    tpu.vector_store %arg3[%c0_4, %c0_5], %18 {strides = array<i32>} : memref<16x512xf32, #tpu.memory_space<vmem>>, vector<16x512xf32>,
    return
  }
  func.func @transform_0(%arg0: i32, %arg1: i32) -> (i32, i32) {
    %c0_i32 = arith.constant 0 : i32
    %c0_i32_0 = arith.constant 0 : i32
    return %arg0, %c0_i32 : i32, i32
  }
  func.func @transform_1(%arg0: i32, %arg1: i32) -> (i32, i32) {
    %c0_i32 = arith.constant 0 : i32
    return %arg0, %arg1 : i32, i32
  }
}

</mosaic_0001>

<llo_original>
// kernel: tpu_custom_call.1
$region0: #{tpu_custom_call.1}
  #allocation0 [shape = 'u32[]', space=smem, size = 0x4, offset = 0x4, fixed_abs, tag = 'smem constant byte address 0x4 - core index']
  #allocation1 [shape = 'u32[144,128]{1,0:T(1,128)}', space=vmem, size = 0x12000, scoped, tag = 'internal scratch']
  %s0 = inlined_call_operand.vmem [shape: s32[16,1], index: 0, kind: input, shape index: {}]
  %s1 = inlined_call_operand.hbm [shape: f32[16,512], index: 1, kind: output, shape index: {}]
  %s2 = sld [smem:[#allocation0]]
  $region14: #{tpu_custom_call.1} parent=0
    _
  %s4 = ssub.s32 1, %s2
  %s5 = scalar_select 0, %s4, %s2
  $region1: #{tpu_custom_call.1} parent=0
    #allocation2 [shape = 'u8[32768]{0}', space=vmem, size = 0x8000, scoped, tag = 'output window, operand 0, single buffered']
    #allocation3 [shape = 's32[1]{0}', space=sflag, size = 0x4, scoped, tag = 'scoped memory for tpu_custom_call.1']
    %6 = vsyncpa [#allocation3], 0
    // Predicated region
    $region2: #{tpu_custom_call.1} parent=1 // pred_check
      _
    $region3: #{tpu_custom_call.1} parent=1 // pred_check_branch
      %8 = sbr.rel (0) target = $region5
    $region4: #{tpu_custom_call.1} parent=1 // pred_region
      _
    $region5: #{tpu_custom_call.1} parent=1 // pred_fallthru
      _
    %s9 = smul.u32 0, 512
    %v10 = vld [vmem:[%s0] sm:$0xff]
    %v11 = vld [vmem:[%s0 + $0x8] sm:$0xff]
    %v12 = vstv %s9
    %v13 = vsub.s32 %v10, %v12
    %v14 = vsub.s32 %v11, %v12
    %s15 = ssub.s32 0, %s9
    %v16 = vlaneseq
    %v17 = vand.u32 %v16, 127
    %v18 = vadd.s32 %v17, 128
    %v19 = vadd.s32 %v17, 256
    %v20 = vadd.s32 %v17, 384
    %21 = vset.pattern.permute.xlu0 0
    %22 = vperm.xlu0 %21, %v13
    %v23 = vpop.permute.xlu0 %22
    %24 = vset.pattern.permute.xlu0 0
    %25 = vperm.xlu0 %24, %v14
    %v26 = vpop.permute.xlu0 %25
    %vm27 = vcmp.eq.s32.totalorder %v17, %v23
    %vm28 = vcmp.eq.s32.totalorder %v18, %v23
    %vm29 = vcmp.eq.s32.totalorder %v19, %v23
    %vm30 = vcmp.eq.s32.totalorder %v20, %v23
    %vm31 = vcmp.eq.s32.totalorder %v17, %v26
    %vm32 = vcmp.eq.s32.totalorder %v18, %v26
    %vm33 = vcmp.eq.s32.totalorder %v19, %v26
    %vm34 = vcmp.eq.s32.totalorder %v20, %v26
    %v35 = vsel %vm27, 0.9, 0.00019607843
    %v36 = vsel %vm28, 0.9, 0.00019607843
    %v37 = vsel %vm29, 0.9, 0.00019607843
    %v38 = vsel %vm30, 0.9, 0.00019607843
    %v39 = vsel %vm31, 0.9, 0.00019607843
    %v40 = vsel %vm32, 0.9, 0.00019607843
    %v41 = vsel %vm33, 0.9, 0.00019607843
    %v42 = vsel %vm34, 0.9, 0.00019607843
    %v43 = vstv %s15
    %vm44 = vcmp.eq.s32.totalorder %v17, %v43
    %vm45 = vcmp.eq.s32.totalorder %v18, %v43
    %vm46 = vcmp.eq.s32.totalorder %v19, %v43
    %vm47 = vcmp.eq.s32.totalorder %v20, %v43
    %vm48 = vcmp.eq.s32.totalorder %v10, 0
    %vm49 = vcmp.eq.s32.totalorder %v11, 0
    %v50 = vsel %vm48, 1, 0
    %v51 = vsel %vm49, 1, 0
    %52 = vset.pattern.permute.xlu0 0
    %53 = vperm.xlu0 %52, %v50
    %v54 = vpop.permute.xlu0 %53
    %55 = vset.pattern.permute.xlu0 0
    %56 = vperm.xlu0 %55, %v51
    %v57 = vpop.permute.xlu0 %56
    %vm58 = vcmp.eq.s32.totalorder %v54, 1
    %vm59 = vcmp.eq.s32.totalorder %v57, 1
    %vm60 = vmor %vm44, %vm58
    %vm61 = vmor %vm45, %vm58
    %vm62 = vmor %vm46, %vm58
    %vm63 = vmor %vm47, %vm58
    %vm64 = vmor %vm44, %vm59
    %vm65 = vmor %vm45, %vm59
    %vm66 = vmor %vm46, %vm59
    %vm67 = vmor %vm47, %vm59
    %v68 = vsel %vm60, 0.0, %v35
    %v69 = vsel %vm61, 0.0, %v36
    %v70 = vsel %vm62, 0.0, %v37
    %v71 = vsel %vm63, 0.0, %v38
    %v72 = vsel %vm64, 0.0, %v39
    %v73 = vsel %vm65, 0.0, %v40
    %v74 = vsel %vm66, 0.0, %v41
    %v75 = vsel %vm67, 0.0, %v42
    %76 = vst [vmem:[#allocation2] sm:$0xff] %v68
    %77 = vst [vmem:[#allocation2 + $0x8] sm:$0xff] %v69
    %78 = vst [vmem:[#allocation2 + $0x10] sm:$0xff] %v70
    %79 = vst [vmem:[#allocation2 + $0x18] sm:$0xff] %v71
    %80 = vst [vmem:[#allocation2 + $0x20] sm:$0xff] %v72
    %81 = vst [vmem:[#allocation2 + $0x28] sm:$0xff] %v73
    %82 = vst [vmem:[#allocation2 + $0x30] sm:$0xff] %v74
    %83 = vst [vmem:[#allocation2 + $0x38] sm:$0xff] %v75
    // Predicated region
    $region6: #{tpu_custom_call.1} parent=1 // pred_check
      _
    $region7: #{tpu_custom_call.1} parent=1 // pred_check_branch
      %85 = sbr.rel (0) target = $region9
    $region8: #{tpu_custom_call.1} parent=1 // pred_region
      %s87 = ssub.s32 1024, 1024
      %88 = vsyncadd [#allocation3], %s87
      %s89 = sshll.u32 [#allocation2], 4
      %s90 = int_to_ptr.vmem [resolvable:$true] %s89
      %95 = dma.vmem_to_hbm [thread:$0]  %s90, 1024, %s1, [#allocation3], 512, 512, 32
    $region9: #{tpu_custom_call.1} parent=1 // pred_fallthru
      _
    // Predicated region
    $region10: #{tpu_custom_call.1} parent=1 // pred_check
      _
    $region11: #{tpu_custom_call.1} parent=1 // pred_check_branch
      %97 = sbr.rel (0) target = $region13
    $region12: #{tpu_custom_call.1} parent=1 // pred_region
      %98 = dma.done [#allocation3], 1024
    $region13: #{tpu_custom_call.1} parent=1 // pred_fallthru
      _
    %99 = vsyncpa [#allocation3], 1

</llo_original>
